<compile_context>
chip_gen: v7x
topology: tpu7x:2x2x1
jax: 0.10.0
libtpu: 0.0.40
codegen_flags: <defaults>
</compile_context>

<pallas_src>
import jax
import jax.numpy as jnp
from jax.experimental import pallas as pl
from jax.experimental.pallas import tpu as pltpu

IN_DIM = 28 * 28    # 784
H1 = 256
H2 = 64
OUT = 10
OUT_PAD = 128       # fc3 output padded to a full lane width
B_TILE = 512        # default batch rows per grid step


def _round_up(n, m):
    return ((n + m - 1) // m) * m


def _mlp_kernel(x_ref, w1_ref, w2_ref, w3_ref, bias_ref, probs_ref):
    # x_ref: (bb, 784) f32 | w1: (784,256) bf16 | w2: (256,64) bf16 | w3: (64,128) bf16
    # bias_ref: (3, 256) f32 (rows = b1, b2-padded, b3-padded) | probs_ref: (bb, 128) f32
    x = x_ref[...].astype(jnp.bfloat16)
    bpk = bias_ref[...]                                           # (3, 256) f32

    # fc1 + sigmoid (MXU bf16 matmul, f32 accumulate; elementwise stays f32)
    h1 = jnp.dot(x, w1_ref[...], preferred_element_type=jnp.float32)
    h1 = jax.nn.sigmoid(h1 + bpk[0:1, :H1])                       # (bb, 256) f32

    # fc2 + sigmoid
    h2 = jnp.dot(h1.astype(jnp.bfloat16), w2_ref[...],
                 preferred_element_type=jnp.float32)
    h2 = jax.nn.sigmoid(h2 + bpk[1:2, :H2])                       # (bb, 64) f32

    # fc3 (output dim pre-padded to 128 zero columns) + sigmoid; lane-dense store.
    logits = jnp.dot(h2.astype(jnp.bfloat16), w3_ref[...],
                     preferred_element_type=jnp.float32)
    probs_ref[...] = jax.nn.sigmoid(logits + bpk[2:3, :OUT_PAD])  # (bb, 128) f32


def nn_img2num_forward(imgs, params, *, block_b=B_TILE):
    """imgs: (B, 28, 28) or (28, 28) float32.

    Returns (idx, probs): per-image argmax class (int32) and the 10 sigmoid outputs.
    """
    w1, w2, w3p, bias_pack = params
    single = imgs.ndim == 2
    x = imgs.reshape(-1, IN_DIM).astype(jnp.float32)
    b = x.shape[0]

    # Batch tile: at most block_b rows, at least a sublane-aligned (mult. of 8) block.
    bb = min(block_b, _round_up(b, 8))
    b_pad = _round_up(b, bb)
    if b_pad != b:
        x = jnp.pad(x, ((0, b_pad - b), (0, 0)))

    probs_pad = pl.pallas_call(
        _mlp_kernel,
        out_shape=jax.ShapeDtypeStruct((b_pad, OUT_PAD), jnp.float32),
        grid=(b_pad // bb,),
        in_specs=[
            pl.BlockSpec((bb, IN_DIM), lambda i: (i, 0)),     # x: tiled over batch
            pl.BlockSpec((IN_DIM, H1), lambda i: (0, 0)),     # w1: VMEM-resident
            pl.BlockSpec((H1, H2), lambda i: (0, 0)),         # w2: VMEM-resident
            pl.BlockSpec((H2, OUT_PAD), lambda i: (0, 0)),    # w3 (padded): VMEM-resident
            pl.BlockSpec((3, H1), lambda i: (0, 0)),          # packed biases
        ],
        out_specs=pl.BlockSpec((bb, OUT_PAD), lambda i: (i, 0)),
        compiler_params=pltpu.CompilerParams(
            dimension_semantics=("parallel",)),
    )(x, w1, w2, w3p, bias_pack)

    probs = probs_pad[:b, :OUT]
    # argmax on host over the 10 real lanes (sigmoid is monotonic; matches torch.max).
    idx = jnp.argmax(probs, axis=-1).astype(jnp.int32)
    if single:
        return idx[0], probs[0]
    return idx, probs


def init_params(key):
    """Deterministic init mimicking nn.Linear's U(-1/sqrt(fan_in), 1/sqrt(fan_in))."""
    ks = jax.random.split(key, 6)

    def lin(kw, kb, fan_in, fan_out):
        bound = 1.0 / jnp.sqrt(jnp.float32(fan_in))
        w = jax.random.uniform(kw, (fan_in, fan_out), jnp.float32, -bound, bound)
        b = jax.random.uniform(kb, (fan_out,), jnp.float32, -bound, bound)
        return w, b

    w1, b1 = lin(ks[0], ks[1], IN_DIM, H1)
    w2, b2 = lin(ks[2], ks[3], H1, H2)
    w3, b3 = lin(ks[4], ks[5], H2, OUT)

    # bf16 weights: halves the dominant w1 HBM->VMEM traffic; MXU-native w/ f32 acc.
    w1 = w1.astype(jnp.bfloat16)
    w2 = w2.astype(jnp.bfloat16)
    # Pad fc3's output dim to 128 lanes (zero columns) -> lane-dense last matmul/store.
    w3p = jnp.zeros((H2, OUT_PAD), jnp.float32).at[:, :OUT].set(w3).astype(jnp.bfloat16)

    # Pack biases (f32) into a single (3, 256) buffer: one tiny DMA instead of three.
    bias_pack = jnp.zeros((3, H1), jnp.float32)
    bias_pack = bias_pack.at[0, :H1].set(b1)
    bias_pack = bias_pack.at[1, :H2].set(b2)
    bias_pack = bias_pack.at[2, :OUT].set(b3)
    return w1, w2, w3p, bias_pack


def _reference_forward(imgs, params):
    """Pure-JAX reference mirroring the kernel's bf16 rounding at the dot inputs."""
    w1, w2, w3p, bias_pack = params
    x = imgs.reshape(-1, IN_DIM).astype(jnp.float32)
    b1 = bias_pack[0:1, :H1]
    b2 = bias_pack[1:2, :H2]
    b3 = bias_pack[2:3, :OUT]

    def lin(a, w, b):
        a16 = a.astype(jnp.bfloat16).astype(jnp.float32)
        return jnp.dot(a16, w.astype(jnp.float32)) + b

    h1 = jax.nn.sigmoid(lin(x, w1, b1))
    h2 = jax.nn.sigmoid(lin(h1, w2, b2))
    h3 = jax.nn.sigmoid(lin(h2, w3p[:, :OUT], b3))
    return jnp.argmax(h3, axis=-1).astype(jnp.int32), h3


if __name__ == "__main__":
    key = jax.random.PRNGKey(0)
    k_img, k_params = jax.random.split(key)

    # A small batch of "MNIST-like" normalized 28x28 images (module's batch_size is 64).
    B = 64
    imgs = jax.random.normal(k_img, (B, 28, 28), dtype=jnp.float32)
    params = init_params(k_params)

    idx, probs = nn_img2num_forward(imgs, params)
    jax.block_until_ready((idx, probs))

    ref_idx, ref_probs = _reference_forward(imgs, params)
    assert idx.shape == (B,) and probs.shape == (B, OUT)
    assert jnp.allclose(probs, ref_probs, atol=5e-3, rtol=5e-3), "probs mismatch"
    # argmax must agree up to bf16-level numerical ties: the class the kernel picked
    # must score within tolerance of the reference max for every image.
    kern_top = jnp.take_along_axis(ref_probs, idx[:, None], axis=1)[:, 0]
    ref_top = jnp.max(ref_probs, axis=1)
    assert bool(jnp.all(ref_top - kern_top < 1e-2)), "argmax mismatch beyond numerical tie"

    print("KERNEL_OK")
</pallas_src>

<mosaic_0001>
module attributes {stable_mosaic.version = 11 : i64} {
  func.func @_mlp_kernel(%arg0: i32, %arg1: memref<64x784xf32, #tpu.memory_space<vmem>>, %arg2: memref<784x256xbf16, #tpu.memory_space<vmem>>, %arg3: memref<256x64xbf16, #tpu.memory_space<vmem>>, %arg4: memref<64x128xbf16, #tpu.memory_space<vmem>>, %arg5: memref<3x256xf32, #tpu.memory_space<vmem>>, %arg6: memref<64x128xf32, #tpu.memory_space<vmem>>) attributes {dimension_semantics = [#tpu.dimension_semantics<parallel>], iteration_bounds = array<i64: 1>, scalar_prefetch = 0 : i64, scratch_operands = 0 : i64, tpu.core_type = #tpu.core_type<tc>, window_params = [{transform_indices = @transform_0, window_bounds = array<i64: 64, 784>}, {pipeline_mode = #tpu.pipeline_mode<synchronous>, transform_indices = @transform_1, window_bounds = array<i64: 784, 256>}, {pipeline_mode = #tpu.pipeline_mode<synchronous>, transform_indices = @transform_2, window_bounds = array<i64: 256, 64>}, {pipeline_mode = #tpu.pipeline_mode<synchronous>, transform_indices = @transform_3, window_bounds = array<i64: 64, 128>}, {pipeline_mode = #tpu.pipeline_mode<synchronous>, transform_indices = @transform_4, window_bounds = array<i64: 3, 256>}, {transform_indices = @transform_5, window_bounds = array<i64: 64, 128>}]} {
    %c0 = arith.constant 0 : index
    %c0_0 = arith.constant 0 : index
    %0 = vector.load %arg1[%c0, %c0_0] : memref<64x784xf32, #tpu.memory_space<vmem>>, vector<64x784xf32>
    %1 = arith.truncf %0 : vector<64x784xf32> to vector<64x784xbf16>
    %c0_1 = arith.constant 0 : index
    %c0_2 = arith.constant 0 : index
    %2 = vector.load %arg5[%c0_1, %c0_2] : memref<3x256xf32, #tpu.memory_space<vmem>>, vector<3x256xf32>
    %c0_3 = arith.constant 0 : index
    %c0_4 = arith.constant 0 : index
    %3 = vector.load %arg2[%c0_3, %c0_4] : memref<784x256xbf16, #tpu.memory_space<vmem>>, vector<784x256xbf16>
    %cst = arith.constant dense<0.000000e+00> : vector<64x256xf32>
    %4 = tpu.matmul %1, %3, %cst {dimension_numbers = #tpu.dot_dimension_numbers<[1], [0], [0], [1], [0, 0, 1, 1], [], []>} : vector<64x784xbf16>, vector<784x256xbf16>, vector<64x256xf32> -> vector<64x256xf32>
    %5 = vector.extract_strided_slice %2 {offsets = [0, 0], sizes = [1, 256], strides = [1, 1]} : vector<3x256xf32> to vector<1x256xf32>
    %6 = vector.broadcast %5 : vector<1x256xf32> to vector<64x256xf32>
    %7 = arith.addf %4, %6 : vector<64x256xf32>
    %8 = arith.negf %7 : vector<64x256xf32>
    %9 = math.exp %8 : vector<64x256xf32>
    %cst_5 = arith.constant 1.000000e+00 : f32
    %10 = vector.broadcast %cst_5 : f32 to vector<64x256xf32>
    %11 = arith.addf %10, %9 : vector<64x256xf32>
    %12 = arith.divf %10, %11 : vector<64x256xf32>
    %13 = arith.truncf %12 : vector<64x256xf32> to vector<64x256xbf16>
    %c0_6 = arith.constant 0 : index
    %c0_7 = arith.constant 0 : index
    %14 = vector.load %arg3[%c0_6, %c0_7] : memref<256x64xbf16, #tpu.memory_space<vmem>>, vector<256x64xbf16>
    %cst_8 = arith.constant dense<0.000000e+00> : vector<64x64xf32>
    %15 = tpu.matmul %13, %14, %cst_8 {dimension_numbers = #tpu.dot_dimension_numbers<[1], [0], [0], [1], [0, 0, 1, 1], [], []>} : vector<64x256xbf16>, vector<256x64xbf16>, vector<64x64xf32> -> vector<64x64xf32>
    %16 = vector.extract_strided_slice %2 {offsets = [1, 0], sizes = [1, 64], strides = [1, 1]} : vector<3x256xf32> to vector<1x64xf32>
    %17 = vector.broadcast %16 : vector<1x64xf32> to vector<64x64xf32>
    %18 = arith.addf %15, %17 : vector<64x64xf32>
    %19 = arith.negf %18 : vector<64x64xf32>
    %20 = math.exp %19 : vector<64x64xf32>
    %cst_9 = arith.constant 1.000000e+00 : f32
    %21 = vector.broadcast %cst_9 : f32 to vector<64x64xf32>
    %22 = arith.addf %21, %20 : vector<64x64xf32>
    %23 = arith.divf %21, %22 : vector<64x64xf32>
    %24 = arith.truncf %23 : vector<64x64xf32> to vector<64x64xbf16>
    %c0_10 = arith.constant 0 : index
    %c0_11 = arith.constant 0 : index
    %25 = vector.load %arg4[%c0_10, %c0_11] : memref<64x128xbf16, #tpu.memory_space<vmem>>, vector<64x128xbf16>
    %cst_12 = arith.constant dense<0.000000e+00> : vector<64x128xf32>
    %26 = tpu.matmul %24, %25, %cst_12 {dimension_numbers = #tpu.dot_dimension_numbers<[1], [0], [0], [1], [0, 0, 1, 1], [], []>} : vector<64x64xbf16>, vector<64x128xbf16>, vector<64x128xf32> -> vector<64x128xf32>
    %27 = vector.extract_strided_slice %2 {offsets = [2, 0], sizes = [1, 128], strides = [1, 1]} : vector<3x256xf32> to vector<1x128xf32>
    %28 = vector.broadcast %27 : vector<1x128xf32> to vector<64x128xf32>
    %29 = arith.addf %26, %28 : vector<64x128xf32>
    %30 = arith.negf %29 : vector<64x128xf32>
    %31 = math.exp %30 : vector<64x128xf32>
    %cst_13 = arith.constant 1.000000e+00 : f32
    %32 = vector.broadcast %cst_13 : f32 to vector<64x128xf32>
    %33 = arith.addf %32, %31 : vector<64x128xf32>
    %34 = arith.divf %32, %33 : vector<64x128xf32>
    %c0_14 = arith.constant 0 : index
    %c0_15 = arith.constant 0 : index
    %35 = vector.load %arg6[%c0_14, %c0_15] : memref<64x128xf32, #tpu.memory_space<vmem>>, vector<64x128xf32>
    tpu.vector_store %arg6[%c0_14, %c0_15], %34 {strides = array<i32>} : memref<64x128xf32, #tpu.memory_space<vmem>>, vector<64x128xf32>,
    return
  }
  func.func @transform_0(%arg0: i32) -> (i32, i32) {
    %c0_i32 = arith.constant 0 : i32
    %c0_i32_0 = arith.constant 0 : i32
    return %arg0, %c0_i32 : i32, i32
  }
  func.func @transform_1(%arg0: i32) -> (i32, i32) {
    %c0_i32 = arith.constant 0 : i32
    %c0_i32_0 = arith.constant 0 : i32
    %c0_i32_1 = arith.constant 0 : i32
    return %c0_i32, %c0_i32_0 : i32, i32
  }
  func.func @transform_2(%arg0: i32) -> (i32, i32) {
    %c0_i32 = arith.constant 0 : i32
    %c0_i32_0 = arith.constant 0 : i32
    %c0_i32_1 = arith.constant 0 : i32
    return %c0_i32, %c0_i32_0 : i32, i32
  }
  func.func @transform_3(%arg0: i32) -> (i32, i32) {
    %c0_i32 = arith.constant 0 : i32
    %c0_i32_0 = arith.constant 0 : i32
    %c0_i32_1 = arith.constant 0 : i32
    return %c0_i32, %c0_i32_0 : i32, i32
  }
  func.func @transform_4(%arg0: i32) -> (i32, i32) {
    %c0_i32 = arith.constant 0 : i32
    %c0_i32_0 = arith.constant 0 : i32
    %c0_i32_1 = arith.constant 0 : i32
    return %c0_i32, %c0_i32_0 : i32, i32
  }
  func.func @transform_5(%arg0: i32) -> (i32, i32) {
    %c0_i32 = arith.constant 0 : i32
    %c0_i32_0 = arith.constant 0 : i32
    return %arg0, %c0_i32 : i32, i32
  }
}

</mosaic_0001>

<llo_original>
// kernel: tpu_custom_call.1
$region0: #{tpu_custom_call.1}
  #allocation0 [shape = 'u32[]', space=smem, size = 0x4, offset = 0x4, fixed_abs, tag = 'smem constant byte address 0x4 - core index']
  #allocation1 [shape = 'u32[144,128]{1,0:T(1,128)}', space=vmem, size = 0x12000, scoped, tag = 'internal scratch']
  %s0 = inlined_call_operand.hbm [shape: f32[64,784], index: 0, kind: input, shape index: {}]
  %s1 = inlined_call_operand.hbm [shape: bf16[784,256], index: 1, kind: input, shape index: {}]
  %s2 = inlined_call_operand.vmem [shape: bf16[256,64], index: 2, kind: input, shape index: {}]
  %s3 = inlined_call_operand.vmem [shape: bf16[64,128], index: 3, kind: input, shape index: {}]
  %s4 = inlined_call_operand.vmem [shape: f32[3,256], index: 4, kind: input, shape index: {}]
  %s5 = inlined_call_operand.hbm [shape: f32[64,128], index: 5, kind: output, shape index: {}]
  %s6 = sld [smem:[#allocation0]]
  $region38: #{tpu_custom_call.1} parent=0
    _
  %s8 = ssub.s32 1, %s6
  %s9 = scalar_select 0, %s8, %s6
  $region1: #{tpu_custom_call.1} parent=0
    #allocation2 [shape = 'u8[229376]{0}', space=vmem, size = 0x38000, scoped, tag = 'input window, operand 0, single buffered']
    #allocation3 [shape = 's32[1]{0}', space=sflag, size = 0x4, scoped, tag = 'scoped memory for tpu_custom_call.1']
    #allocation4 [shape = 's32[1]{0}', space=sflag, size = 0x4, scoped, tag = 'scoped memory for tpu_custom_call.1']
    #allocation5 [shape = 'u8[401408]{0}', space=vmem, size = 0x62000, scoped, tag = 'input window, operand 1, single buffered']
    #allocation6 [shape = 's32[1]{0}', space=sflag, size = 0x4, scoped, tag = 'scoped memory for tpu_custom_call.1']
    #allocation7 [shape = 'u8[32768]{0}', space=vmem, size = 0x8000, scoped, tag = 'output window, operand 0, single buffered']
    %10 = vsyncpa [#allocation3], 0
    %11 = vsyncpa [#allocation6], 0
    %12 = vsyncpa [#allocation4], 0
    // Predicated region
    $region2: #{tpu_custom_call.1} parent=1 // pred_check
      _
    $region3: #{tpu_custom_call.1} parent=1 // pred_check_branch
      %14 = sbr.rel (0) target = $region5
    $region4: #{tpu_custom_call.1} parent=1 // pred_region
      %s16 = ssub.s32 7168, 7168
      %17 = vsyncadd [#allocation3], %s16
      %s18 = sshll.u32 [#allocation2], 4
      %s19 = int_to_ptr.vmem [resolvable:$true] %s18
      %24 = dma.hbm_to_vmem [thread:$0]  %s0, 7168, %s19, [#allocation3], 896, 896, 56
    $region5: #{tpu_custom_call.1} parent=1 // pred_fallthru
      _
    // Predicated region
    $region6: #{tpu_custom_call.1} parent=1 // pred_check
      _
    $region7: #{tpu_custom_call.1} parent=1 // pred_check_branch
      %26 = sbr.rel (0) target = $region9
    $region8: #{tpu_custom_call.1} parent=1 // pred_region
      %s28 = ssub.s32 12544, 12544
      %29 = vsyncadd [#allocation6], %s28
      %s30 = sshll.u32 [#allocation5], 4
      %s31 = int_to_ptr.vmem [resolvable:$true] %s30
      %36 = dma.hbm_to_vmem [thread:$0]  %s1, 12544, %s31, [#allocation6], 128, 128, 8
    $region9: #{tpu_custom_call.1} parent=1 // pred_fallthru
      _
    // Predicated region
    $region10: #{tpu_custom_call.1} parent=1 // pred_check
      _
    $region11: #{tpu_custom_call.1} parent=1 // pred_check_branch
      %38 = sbr.rel (0) target = $region13
    $region12: #{tpu_custom_call.1} parent=1 // pred_region
      _
    $region13: #{tpu_custom_call.1} parent=1 // pred_fallthru
      _
    // Predicated region
    $region14: #{tpu_custom_call.1} parent=1 // pred_check
      _
    $region15: #{tpu_custom_call.1} parent=1 // pred_check_branch
      %40 = sbr.rel (0) target = $region17
    $region16: #{tpu_custom_call.1} parent=1 // pred_region
      _
    $region17: #{tpu_custom_call.1} parent=1 // pred_fallthru
      _
    // Predicated region
    $region18: #{tpu_custom_call.1} parent=1 // pred_check
      _
    $region19: #{tpu_custom_call.1} parent=1 // pred_check_branch
      %42 = sbr.rel (0) target = $region21
    $region20: #{tpu_custom_call.1} parent=1 // pred_region
      _
    $region21: #{tpu_custom_call.1} parent=1 // pred_fallthru
      _
    // Predicated region
    $region22: #{tpu_custom_call.1} parent=1 // pred_check
      _
    $region23: #{tpu_custom_call.1} parent=1 // pred_check_branch
      %44 = sbr.rel (0) target = $region25
    $region24: #{tpu_custom_call.1} parent=1 // pred_region
      %45 = dma.done [#allocation3], 7168
    $region25: #{tpu_custom_call.1} parent=1 // pred_fallthru
      _
    // Predicated region
    $region26: #{tpu_custom_call.1} parent=1 // pred_check
      _
    $region27: #{tpu_custom_call.1} parent=1 // pred_check_branch
      %47 = sbr.rel (0) target = $region29
    $region28: #{tpu_custom_call.1} parent=1 // pred_region
      %48 = dma.done [#allocation6], 12544
    $region29: #{tpu_custom_call.1} parent=1 // pred_fallthru
      _
    %v50 = vld [vmem:[#allocation2] sm:$0xff]
    %v51 = vld [vmem:[#allocation2 + $0x8] sm:$0xff]
    %v52 = vld [vmem:[#allocation2 + $0x10] sm:$0xff]
    %v53 = vld [vmem:[#allocation2 + $0x18] sm:$0xff]
    %v54 = vld [vmem:[#allocation2 + $0x20] sm:$0xff]
    %v55 = vld [vmem:[#allocation2 + $0x28] sm:$0xff]
    %v56 = vld [vmem:[#allocation2 + $0x30] sm:$0xff]
    %v57 = vld [vmem:[#allocation2 + $0x38] sm:$0xff]
    %v58 = vld [vmem:[#allocation2 + $0x40] sm:$0xff]
    %v59 = vld [vmem:[#allocation2 + $0x48] sm:$0xff]
    %v60 = vld [vmem:[#allocation2 + $0x50] sm:$0xff]
    %v61 = vld [vmem:[#allocation2 + $0x58] sm:$0xff]
    %v62 = vld [vmem:[#allocation2 + $0x60] sm:$0xff]
    %v63 = vld [vmem:[#allocation2 + $0x68] sm:$0xff]
    %v64 = vld [vmem:[#allocation2 + $0x70] sm:$0xff]
    %v65 = vld [vmem:[#allocation2 + $0x78] sm:$0xff]
    %v66 = vld [vmem:[#allocation2 + $0x80] sm:$0xff]
    %v67 = vld [vmem:[#allocation2 + $0x88] sm:$0xff]
    %v68 = vld [vmem:[#allocation2 + $0x90] sm:$0xff]
    %v69 = vld [vmem:[#allocation2 + $0x98] sm:$0xff]
    %v70 = vld [vmem:[#allocation2 + $0xa0] sm:$0xff]
    %v71 = vld [vmem:[#allocation2 + $0xa8] sm:$0xff]
    %v72 = vld [vmem:[#allocation2 + $0xb0] sm:$0xff]
    %v73 = vld [vmem:[#allocation2 + $0xb8] sm:$0xff]
    %v74 = vld [vmem:[#allocation2 + $0xc0] sm:$0xff]
    %v75 = vld [vmem:[#allocation2 + $0xc8] sm:$0xff]
    %v76 = vld [vmem:[#allocation2 + $0xd0] sm:$0xff]
    %v77 = vld [vmem:[#allocation2 + $0xd8] sm:$0xff]
    %v78 = vld [vmem:[#allocation2 + $0xe0] sm:$0xff]
    %v79 = vld [vmem:[#allocation2 + $0xe8] sm:$0xff]
    %v80 = vld [vmem:[#allocation2 + $0xf0] sm:$0xff]
    %v81 = vld [vmem:[#allocation2 + $0xf8] sm:$0xff]
    %v82 = vld [vmem:[#allocation2 + $0x100] sm:$0xff]
    %v83 = vld [vmem:[#allocation2 + $0x108] sm:$0xff]
    %v84 = vld [vmem:[#allocation2 + $0x110] sm:$0xff]
    %v85 = vld [vmem:[#allocation2 + $0x118] sm:$0xff]
    %v86 = vld [vmem:[#allocation2 + $0x120] sm:$0xff]
    %v87 = vld [vmem:[#allocation2 + $0x128] sm:$0xff]
    %v88 = vld [vmem:[#allocation2 + $0x130] sm:$0xff]
    %v89 = vld [vmem:[#allocation2 + $0x138] sm:$0xff]
    %v90 = vld [vmem:[#allocation2 + $0x140] sm:$0xff]
    %v91 = vld [vmem:[#allocation2 + $0x148] sm:$0xff]
    %v92 = vld [vmem:[#allocation2 + $0x150] sm:$0xff]
    %v93 = vld [vmem:[#allocation2 + $0x158] sm:$0xff]
    %v94 = vld [vmem:[#allocation2 + $0x160] sm:$0xff]
    %v95 = vld [vmem:[#allocation2 + $0x168] sm:$0xff]
    %v96 = vld [vmem:[#allocation2 + $0x170] sm:$0xff]
    %v97 = vld [vmem:[#allocation2 + $0x178] sm:$0xff]
    %v98 = vld [vmem:[#allocation2 + $0x180] sm:$0xff]
    %v99 = vld [vmem:[#allocation2 + $0x188] sm:$0xff]
    %v100 = vld [vmem:[#allocation2 + $0x190] sm:$0xff]
    %v101 = vld [vmem:[#allocation2 + $0x198] sm:$0xff]
    %v102 = vld [vmem:[#allocation2 + $0x1a0] sm:$0xff]
    %v103 = vld [vmem:[#allocation2 + $0x1a8] sm:$0xff]
    %v104 = vld [vmem:[#allocation2 + $0x1b0] sm:$0xff]
    %v105 = vld [vmem:[#allocation2 + $0x1b8] sm:$0xff]
    %v106 = vpack.c.bf16 %v57, %v50
    %v107 = vpack.c.bf16 %v58, %v51
    %v108 = vpack.c.bf16 %v59, %v52
    %v109 = vpack.c.bf16 %v60, %v53
    %v110 = vpack.c.bf16 %v61, %v54
    %v111 = vpack.c.bf16 %v62, %v55
    %v112 = vpack.c.bf16 %v63, %v56
    %v113 = vpack.c.bf16 %v71, %v64
    %v114 = vpack.c.bf16 %v72, %v65
    %v115 = vpack.c.bf16 %v73, %v66
    %v116 = vpack.c.bf16 %v74, %v67
    %v117 = vpack.c.bf16 %v75, %v68
    %v118 = vpack.c.bf16 %v76, %v69
    %v119 = vpack.c.bf16 %v77, %v70
    %v120 = vpack.c.bf16 %v85, %v78
    %v121 = vpack.c.bf16 %v86, %v79
    %v122 = vpack.c.bf16 %v87, %v80
    %v123 = vpack.c.bf16 %v88, %v81
    %v124 = vpack.c.bf16 %v89, %v82
    %v125 = vpack.c.bf16 %v90, %v83
    %v126 = vpack.c.bf16 %v91, %v84
    %v127 = vpack.c.bf16 %v99, %v92
    %v128 = vpack.c.bf16 %v100, %v93
    %v129 = vpack.c.bf16 %v101, %v94
    %v130 = vpack.c.bf16 %v102, %v95
    %v131 = vpack.c.bf16 %v103, %v96
    %v132 = vpack.c.bf16 %v104, %v97
    %v133 = vpack.c.bf16 %v105, %v98
    %v134 = vld [vmem:[%s4] sm:$0x77]
    %v135 = vld [vmem:[#allocation5] sm:$0xff]
    %v136 = vld [vmem:[#allocation5 + $0x8] sm:$0xff]
    %v137 = vld [vmem:[#allocation5 + $0x10] sm:$0xff]
    %v138 = vld [vmem:[#allocation5 + $0x18] sm:$0xff]
    %v139 = vld [vmem:[#allocation5 + $0x20] sm:$0xff]
    %v140 = vld [vmem:[#allocation5 + $0x28] sm:$0xff]
    %v141 = vld [vmem:[#allocation5 + $0x30] sm:$0xff]
    %v142 = vld [vmem:[#allocation5 + $0x38] sm:$0xff]
    %v143 = vld [vmem:[#allocation5 + $0x40] sm:$0xff]
    %v144 = vld [vmem:[#allocation5 + $0x48] sm:$0xff]
    %v145 = vld [vmem:[#allocation5 + $0x50] sm:$0xff]
    %v146 = vld [vmem:[#allocation5 + $0x58] sm:$0xff]
    %v147 = vld [vmem:[#allocation5 + $0x60] sm:$0xff]
    %v148 = vld [vmem:[#allocation5 + $0x68] sm:$0xff]
    %v149 = vld [vmem:[#allocation5 + $0x70] sm:$0xff]
    %v150 = vld [vmem:[#allocation5 + $0x78] sm:$0xff]
    %v151 = vld [vmem:[#allocation5 + $0x80] sm:$0xff]
    %v152 = vld [vmem:[#allocation5 + $0x88] sm:$0xff]
    %v153 = vld [vmem:[#allocation5 + $0x90] sm:$0xff]
    %v154 = vld [vmem:[#allocation5 + $0x98] sm:$0xff]
    %v155 = vld [vmem:[#allocation5 + $0xa0] sm:$0xff]
    %v156 = vld [vmem:[#allocation5 + $0xa8] sm:$0xff]
    %v157 = vld [vmem:[#allocation5 + $0xb0] sm:$0xff]
    %v158 = vld [vmem:[#allocation5 + $0xb8] sm:$0xff]
    %v159 = vld [vmem:[#allocation5 + $0xc0] sm:$0xff]
    %v160 = vld [vmem:[#allocation5 + $0xc8] sm:$0xff]
    %v161 = vld [vmem:[#allocation5 + $0xd0] sm:$0xff]
    %v162 = vld [vmem:[#allocation5 + $0xd8] sm:$0xff]
    %v163 = vld [vmem:[#allocation5 + $0xe0] sm:$0xff]
    %v164 = vld [vmem:[#allocation5 + $0xe8] sm:$0xff]
    %v165 = vld [vmem:[#allocation5 + $0xf0] sm:$0xff]
    %v166 = vld [vmem:[#allocation5 + $0xf8] sm:$0xff]
    %v167 = vld [vmem:[#allocation5 + $0x100] sm:$0xff]
    %v168 = vld [vmem:[#allocation5 + $0x108] sm:$0xff]
    %v169 = vld [vmem:[#allocation5 + $0x110] sm:$0xff]
    %v170 = vld [vmem:[#allocation5 + $0x118] sm:$0xff]
    %v171 = vld [vmem:[#allocation5 + $0x120] sm:$0xff]
    %v172 = vld [vmem:[#allocation5 + $0x128] sm:$0xff]
    %v173 = vld [vmem:[#allocation5 + $0x130] sm:$0xff]
    %v174 = vld [vmem:[#allocation5 + $0x138] sm:$0xff]
    %v175 = vld [vmem:[#allocation5 + $0x140] sm:$0xff]
    %v176 = vld [vmem:[#allocation5 + $0x148] sm:$0xff]
    %v177 = vld [vmem:[#allocation5 + $0x150] sm:$0xff]
    %v178 = vld [vmem:[#allocation5 + $0x158] sm:$0xff]
    %v179 = vld [vmem:[#allocation5 + $0x160] sm:$0xff]
    %v180 = vld [vmem:[#allocation5 + $0x168] sm:$0xff]
    %v181 = vld [vmem:[#allocation5 + $0x170] sm:$0xff]
    %v182 = vld [vmem:[#allocation5 + $0x178] sm:$0xff]
    %v183 = vld [vmem:[#allocation5 + $0x180] sm:$0xff]
    %v184 = vld [vmem:[#allocation5 + $0x188] sm:$0xff]
    %v185 = vld [vmem:[#allocation5 + $0x190] sm:$0xff]
    %v186 = vld [vmem:[#allocation5 + $0x198] sm:$0xff]
    %v187 = vld [vmem:[#allocation5 + $0x1a0] sm:$0xff]
    %v188 = vld [vmem:[#allocation5 + $0x1a8] sm:$0xff]
    %v189 = vld [vmem:[#allocation5 + $0x1b0] sm:$0xff]
    %v190 = vld [vmem:[#allocation5 + $0x1b8] sm:$0xff]
    %v191 = vld [vmem:[#allocation5 + $0x1c0] sm:$0xff]
    %v192 = vld [vmem:[#allocation5 + $0x1c8] sm:$0xff]
    %v193 = vld [vmem:[#allocation5 + $0x1d0] sm:$0xff]
    %v194 = vld [vmem:[#allocation5 + $0x1d8] sm:$0xff]
    %v195 = vld [vmem:[#allocation5 + $0x1e0] sm:$0xff]
    %v196 = vld [vmem:[#allocation5 + $0x1e8] sm:$0xff]
    %v197 = vld [vmem:[#allocation5 + $0x1f0] sm:$0xff]
    %v198 = vld [vmem:[#allocation5 + $0x1f8] sm:$0xff]
    %v199 = vld [vmem:[#allocation5 + $0x200] sm:$0xff]
    %v200 = vld [vmem:[#allocation5 + $0x208] sm:$0xff]
    %v201 = vld [vmem:[#allocation5 + $0x210] sm:$0xff]
    %v202 = vld [vmem:[#allocation5 + $0x218] sm:$0xff]
    %v203 = vld [vmem:[#allocation5 + $0x220] sm:$0xff]
    %v204 = vld [vmem:[#allocation5 + $0x228] sm:$0xff]
    %v205 = vld [vmem:[#allocation5 + $0x230] sm:$0xff]
    %v206 = vld [vmem:[#allocation5 + $0x238] sm:$0xff]
    %v207 = vld [vmem:[#allocation5 + $0x240] sm:$0xff]
    %v208 = vld [vmem:[#allocation5 + $0x248] sm:$0xff]
    %v209 = vld [vmem:[#allocation5 + $0x250] sm:$0xff]
    %v210 = vld [vmem:[#allocation5 + $0x258] sm:$0xff]
    %v211 = vld [vmem:[#allocation5 + $0x260] sm:$0xff]
    %v212 = vld [vmem:[#allocation5 + $0x268] sm:$0xff]
    %v213 = vld [vmem:[#allocation5 + $0x270] sm:$0xff]
    %v214 = vld [vmem:[#allocation5 + $0x278] sm:$0xff]
    %v215 = vld [vmem:[#allocation5 + $0x280] sm:$0xff]
    %v216 = vld [vmem:[#allocation5 + $0x288] sm:$0xff]
    %v217 = vld [vmem:[#allocation5 + $0x290] sm:$0xff]
    %v218 = vld [vmem:[#allocation5 + $0x298] sm:$0xff]
    %v219 = vld [vmem:[#allocation5 + $0x2a0] sm:$0xff]
    %v220 = vld [vmem:[#allocation5 + $0x2a8] sm:$0xff]
    %v221 = vld [vmem:[#allocation5 + $0x2b0] sm:$0xff]
    %v222 = vld [vmem:[#allocation5 + $0x2b8] sm:$0xff]
    %v223 = vld [vmem:[#allocation5 + $0x2c0] sm:$0xff]
    %v224 = vld [vmem:[#allocation5 + $0x2c8] sm:$0xff]
    %v225 = vld [vmem:[#allocation5 + $0x2d0] sm:$0xff]
    %v226 = vld [vmem:[#allocation5 + $0x2d8] sm:$0xff]
    %v227 = vld [vmem:[#allocation5 + $0x2e0] sm:$0xff]
    %v228 = vld [vmem:[#allocation5 + $0x2e8] sm:$0xff]
    %v229 = vld [vmem:[#allocation5 + $0x2f0] sm:$0xff]
    %v230 = vld [vmem:[#allocation5 + $0x2f8] sm:$0xff]
    %v231 = vld [vmem:[#allocation5 + $0x300] sm:$0xff]
    %v232 = vld [vmem:[#allocation5 + $0x308] sm:$0xff]
    %v234 = vlaneseq
    %v235 = vshrl.u32 %v234, 7
    %v236 = vsub.s32 0, %v235
    %v237 = vrot.slane %v134, %v236
    %v238 = vlaneseq
    %v239 = vshrl.u32 %v238, 7
    %v240 = vsub.s32 4, %v239
    %v241 = vrot.slane %v134, %v240
    %v244 = vlaneseq
    %v245 = vshrl.u32 %v244, 7
    %v246 = vsub.s32 0, %v245
    %v247 = vrot.slane %v237, %v246
    %v248 = vlaneseq
    %v249 = vshrl.u32 %v248, 7
    %v250 = vsub.s32 0, %v249
    %v251 = vrot.slane %v241, %v250
    %v350 = vunpack.c.l.b16 %v135
    %v351 = vunpack.c.h.b16 %v135
    %v352 = vunpack.c.l.b16 %v136
    %v353 = vunpack.c.h.b16 %v136
    %v354 = vunpack.c.l.b16 %v137
    %v355 = vunpack.c.h.b16 %v137
    %v356 = vunpack.c.l.b16 %v138
    %v357 = vunpack.c.h.b16 %v138
    %v358 = vunpack.c.l.b16 %v139
    %v359 = vunpack.c.h.b16 %v139
    %v360 = vunpack.c.l.b16 %v140
    %v361 = vunpack.c.h.b16 %v140
    %v362 = vunpack.c.l.b16 %v141
    %v363 = vunpack.c.h.b16 %v141
    %v364 = vunpack.c.l.b16 %v142
    %v365 = vunpack.c.h.b16 %v142
    %v366 = vunpack.c.l.b16 %v143
    %v367 = vunpack.c.h.b16 %v143
    %v368 = vunpack.c.l.b16 %v144
    %v369 = vunpack.c.h.b16 %v144
    %v370 = vunpack.c.l.b16 %v145
    %v371 = vunpack.c.h.b16 %v145
    %v372 = vunpack.c.l.b16 %v146
    %v373 = vunpack.c.h.b16 %v146
    %v374 = vunpack.c.l.b16 %v147
    %v375 = vunpack.c.h.b16 %v147
    %v376 = vunpack.c.l.b16 %v148
    %v377 = vunpack.c.h.b16 %v148
    %v378 = vunpack.c.l.b16 %v149
    %v379 = vunpack.c.h.b16 %v149
    %v380 = vunpack.c.l.b16 %v150
    %v381 = vunpack.c.h.b16 %v150
    %v382 = vunpack.c.l.b16 %v151
    %v383 = vunpack.c.h.b16 %v151
    %v384 = vunpack.c.l.b16 %v152
    %v385 = vunpack.c.h.b16 %v152
    %v386 = vunpack.c.l.b16 %v153
    %v387 = vunpack.c.h.b16 %v153
    %v388 = vunpack.c.l.b16 %v154
    %v389 = vunpack.c.h.b16 %v154
    %v390 = vunpack.c.l.b16 %v155
    %v391 = vunpack.c.h.b16 %v155
    %v392 = vunpack.c.l.b16 %v156
    %v393 = vunpack.c.h.b16 %v156
    %v394 = vunpack.c.l.b16 %v157
    %v395 = vunpack.c.h.b16 %v157
    %v396 = vunpack.c.l.b16 %v158
    %v397 = vunpack.c.h.b16 %v158
    %v398 = vunpack.c.l.b16 %v159
    %v399 = vunpack.c.h.b16 %v159
    %v400 = vunpack.c.l.b16 %v160
    %v401 = vunpack.c.h.b16 %v160
    %v402 = vunpack.c.l.b16 %v161
    %v403 = vunpack.c.h.b16 %v161
    %v404 = vunpack.c.l.b16 %v162
    %v405 = vunpack.c.h.b16 %v162
    %v406 = vunpack.c.l.b16 %v163
    %v407 = vunpack.c.h.b16 %v163
    %v408 = vunpack.c.l.b16 %v164
    %v409 = vunpack.c.h.b16 %v164
    %v410 = vunpack.c.l.b16 %v165
    %v411 = vunpack.c.h.b16 %v165
    %v412 = vunpack.c.l.b16 %v166
    %v413 = vunpack.c.h.b16 %v166
    %v414 = vunpack.c.l.b16 %v167
    %v415 = vunpack.c.h.b16 %v167
    %v416 = vunpack.c.l.b16 %v168
    %v417 = vunpack.c.h.b16 %v168
    %v418 = vunpack.c.l.b16 %v169
    %v419 = vunpack.c.h.b16 %v169
    %v420 = vunpack.c.l.b16 %v170
    %v421 = vunpack.c.h.b16 %v170
    %v422 = vunpack.c.l.b16 %v171
    %v423 = vunpack.c.h.b16 %v171
    %v424 = vunpack.c.l.b16 %v172
    %v425 = vunpack.c.h.b16 %v172
    %v426 = vunpack.c.l.b16 %v173
    %v427 = vunpack.c.h.b16 %v173
    %v428 = vunpack.c.l.b16 %v174
    %v429 = vunpack.c.h.b16 %v174
    %v430 = vunpack.c.l.b16 %v175
    %v431 = vunpack.c.h.b16 %v175
    %v432 = vunpack.c.l.b16 %v176
    %v433 = vunpack.c.h.b16 %v176
    %v434 = vunpack.c.l.b16 %v177
    %v435 = vunpack.c.h.b16 %v177
    %v436 = vunpack.c.l.b16 %v178
    %v437 = vunpack.c.h.b16 %v178
    %v438 = vunpack.c.l.b16 %v179
    %v439 = vunpack.c.h.b16 %v179
    %v440 = vunpack.c.l.b16 %v180
    %v441 = vunpack.c.h.b16 %v180
    %v442 = vunpack.c.l.b16 %v181
    %v443 = vunpack.c.h.b16 %v181
    %v444 = vunpack.c.l.b16 %v182
    %v445 = vunpack.c.h.b16 %v182
    %v446 = vunpack.c.l.b16 %v183
    %v447 = vunpack.c.h.b16 %v183
    %v448 = vunpack.c.l.b16 %v184
    %v449 = vunpack.c.h.b16 %v184
    %v450 = vunpack.c.l.b16 %v185
    %v451 = vunpack.c.h.b16 %v185
    %v452 = vunpack.c.l.b16 %v186
    %v453 = vunpack.c.h.b16 %v186
    %v454 = vunpack.c.l.b16 %v187
    %v455 = vunpack.c.h.b16 %v187
    %v456 = vunpack.c.l.b16 %v188
    %v457 = vunpack.c.h.b16 %v188
    %v458 = vunpack.c.l.b16 %v189
    %v459 = vunpack.c.h.b16 %v189
    %v460 = vunpack.c.l.b16 %v190
    %v461 = vunpack.c.h.b16 %v190
    %v462 = vunpack.c.l.b16 %v191
    %v463 = vunpack.c.h.b16 %v191
    %v464 = vunpack.c.l.b16 %v192
    %v465 = vunpack.c.h.b16 %v192
    %v466 = vunpack.c.l.b16 %v193
    %v467 = vunpack.c.h.b16 %v193
    %v468 = vunpack.c.l.b16 %v194
    %v469 = vunpack.c.h.b16 %v194
    %v470 = vunpack.c.l.b16 %v195
    %v471 = vunpack.c.h.b16 %v195
    %v472 = vunpack.c.l.b16 %v196
    %v473 = vunpack.c.h.b16 %v196
    %v474 = vunpack.c.l.b16 %v197
    %v475 = vunpack.c.h.b16 %v197
    %v476 = vunpack.c.l.b16 %v198
    %v477 = vunpack.c.h.b16 %v198
    %v478 = vunpack.c.l.b16 %v199
    %v479 = vunpack.c.h.b16 %v199
    %v480 = vunpack.c.l.b16 %v200
    %v481 = vunpack.c.h.b16 %v200
    %v482 = vunpack.c.l.b16 %v201
    %v483 = vunpack.c.h.b16 %v201
    %v484 = vunpack.c.l.b16 %v202
    %v485 = vunpack.c.h.b16 %v202
    %v486 = vunpack.c.l.b16 %v203
    %v487 = vunpack.c.h.b16 %v203
    %v488 = vunpack.c.l.b16 %v204
    %v489 = vunpack.c.h.b16 %v204
    %v490 = vunpack.c.l.b16 %v205
    %v491 = vunpack.c.h.b16 %v205
    %v492 = vunpack.c.l.b16 %v206
    %v493 = vunpack.c.h.b16 %v206
    %v494 = vunpack.c.l.b16 %v207
    %v495 = vunpack.c.h.b16 %v207
    %v496 = vunpack.c.l.b16 %v208
    %v497 = vunpack.c.h.b16 %v208
    %v498 = vunpack.c.l.b16 %v209
    %v499 = vunpack.c.h.b16 %v209
    %v500 = vunpack.c.l.b16 %v210
    %v501 = vunpack.c.h.b16 %v210
    %v502 = vunpack.c.l.b16 %v211
    %v503 = vunpack.c.h.b16 %v211
    %v504 = vunpack.c.l.b16 %v212
    %v505 = vunpack.c.h.b16 %v212
    %v506 = vunpack.c.l.b16 %v213
    %v507 = vunpack.c.h.b16 %v213
    %v508 = vunpack.c.l.b16 %v214
    %v509 = vunpack.c.h.b16 %v214
    %v510 = vunpack.c.l.b16 %v215
    %v511 = vunpack.c.h.b16 %v215
    %v512 = vunpack.c.l.b16 %v216
    %v513 = vunpack.c.h.b16 %v216
    %v514 = vunpack.c.l.b16 %v217
    %v515 = vunpack.c.h.b16 %v217
    %v516 = vunpack.c.l.b16 %v218
    %v517 = vunpack.c.h.b16 %v218
    %v518 = vunpack.c.l.b16 %v219
    %v519 = vunpack.c.h.b16 %v219
    %v520 = vunpack.c.l.b16 %v220
    %v521 = vunpack.c.h.b16 %v220
    %v522 = vunpack.c.l.b16 %v221
    %v523 = vunpack.c.h.b16 %v221
    %v524 = vunpack.c.l.b16 %v222
    %v525 = vunpack.c.h.b16 %v222
    %v526 = vunpack.c.l.b16 %v223
    %v527 = vunpack.c.h.b16 %v223
    %v528 = vunpack.c.l.b16 %v224
    %v529 = vunpack.c.h.b16 %v224
    %v530 = vunpack.c.l.b16 %v225
    %v531 = vunpack.c.h.b16 %v225
    %v532 = vunpack.c.l.b16 %v226
    %v533 = vunpack.c.h.b16 %v226
    %v534 = vunpack.c.l.b16 %v227
    %v535 = vunpack.c.h.b16 %v227
    %v536 = vunpack.c.l.b16 %v228
    %v537 = vunpack.c.h.b16 %v228
    %v538 = vunpack.c.l.b16 %v229
    %v539 = vunpack.c.h.b16 %v229
    %v540 = vunpack.c.l.b16 %v230
    %v541 = vunpack.c.h.b16 %v230
    %v542 = vunpack.c.l.b16 %v231
    %v543 = vunpack.c.h.b16 %v231
    %v544 = vunpack.c.l.b16 %v232
    %v545 = vunpack.c.h.b16 %v232
    %v546 = vpack.c.b16 %v352, %v350
    %v547 = vpack.c.b16 %v353, %v351
    %v548 = vpack.c.b16 %v356, %v354
    %v549 = vpack.c.b16 %v357, %v355
    %v550 = vpack.c.b16 %v360, %v358
    %v551 = vpack.c.b16 %v361, %v359
    %v552 = vpack.c.b16 %v364, %v362
    %v553 = vpack.c.b16 %v365, %v363
    %v554 = vpack.c.b16 %v368, %v366
    %v555 = vpack.c.b16 %v369, %v367
    %v556 = vpack.c.b16 %v372, %v370
    %v557 = vpack.c.b16 %v373, %v371
    %v558 = vpack.c.b16 %v376, %v374
    %v559 = vpack.c.b16 %v377, %v375
    %v560 = vpack.c.b16 %v380, %v378
    %v561 = vpack.c.b16 %v381, %v379
    %v562 = vpack.c.b16 %v384, %v382
    %v563 = vpack.c.b16 %v385, %v383
    %v564 = vpack.c.b16 %v388, %v386
    %v565 = vpack.c.b16 %v389, %v387
    %v566 = vpack.c.b16 %v392, %v390
    %v567 = vpack.c.b16 %v393, %v391
    %v568 = vpack.c.b16 %v396, %v394
    %v569 = vpack.c.b16 %v397, %v395
    %v570 = vpack.c.b16 %v400, %v398
    %v571 = vpack.c.b16 %v401, %v399
    %v572 = vpack.c.b16 %v404, %v402
    %v573 = vpack.c.b16 %v405, %v403
    %v574 = vpack.c.b16 %v408, %v406
    %v575 = vpack.c.b16 %v409, %v407
    %v576 = vpack.c.b16 %v412, %v410
    %v577 = vpack.c.b16 %v413, %v411
    %v578 = vpack.c.b16 %v416, %v414
    %v579 = vpack.c.b16 %v417, %v415
    %v580 = vpack.c.b16 %v420, %v418
    %v581 = vpack.c.b16 %v421, %v419
    %v582 = vpack.c.b16 %v424, %v422
    %v583 = vpack.c.b16 %v425, %v423
    %v584 = vpack.c.b16 %v428, %v426
    %v585 = vpack.c.b16 %v429, %v427
    %v586 = vpack.c.b16 %v432, %v430
    %v587 = vpack.c.b16 %v433, %v431
    %v588 = vpack.c.b16 %v436, %v434
    %v589 = vpack.c.b16 %v437, %v435
    %v590 = vpack.c.b16 %v440, %v438
    %v591 = vpack.c.b16 %v441, %v439
    %v592 = vpack.c.b16 %v444, %v442
    %v593 = vpack.c.b16 %v445, %v443
    %v594 = vpack.c.b16 %v448, %v446
    %v595 = vpack.c.b16 %v449, %v447
    %v596 = vpack.c.b16 %v452, %v450
    %v597 = vpack.c.b16 %v453, %v451
    %v598 = vpack.c.b16 %v456, %v454
    %v599 = vpack.c.b16 %v457, %v455
    %v600 = vpack.c.b16 %v460, %v458
    %v601 = vpack.c.b16 %v461, %v459
    %v602 = vpack.c.b16 %v464, %v462
    %v603 = vpack.c.b16 %v465, %v463
    %v604 = vpack.c.b16 %v468, %v466
    %v605 = vpack.c.b16 %v469, %v467
    %v606 = vpack.c.b16 %v472, %v470
    %v607 = vpack.c.b16 %v473, %v471
    %v608 = vpack.c.b16 %v476, %v474
    %v609 = vpack.c.b16 %v477, %v475
    %v610 = vpack.c.b16 %v480, %v478
    %v611 = vpack.c.b16 %v481, %v479
    %v612 = vpack.c.b16 %v484, %v482
    %v613 = vpack.c.b16 %v485, %v483
    %v614 = vpack.c.b16 %v488, %v486
    %v615 = vpack.c.b16 %v489, %v487
    %v616 = vpack.c.b16 %v492, %v490
    %v617 = vpack.c.b16 %v493, %v491
    %v618 = vpack.c.b16 %v496, %v494
    %v619 = vpack.c.b16 %v497, %v495
    %v620 = vpack.c.b16 %v500, %v498
    %v621 = vpack.c.b16 %v501, %v499
    %v622 = vpack.c.b16 %v504, %v502
    %v623 = vpack.c.b16 %v505, %v503
    %v624 = vpack.c.b16 %v508, %v506
    %v625 = vpack.c.b16 %v509, %v507
    %v626 = vpack.c.b16 %v512, %v510
    %v627 = vpack.c.b16 %v513, %v511
    %v628 = vpack.c.b16 %v516, %v514
    %v629 = vpack.c.b16 %v517, %v515
    %v630 = vpack.c.b16 %v520, %v518
    %v631 = vpack.c.b16 %v521, %v519
    %v632 = vpack.c.b16 %v524, %v522
    %v633 = vpack.c.b16 %v525, %v523
    %v634 = vpack.c.b16 %v528, %v526
    %v635 = vpack.c.b16 %v529, %v527
    %v636 = vpack.c.b16 %v532, %v530
    %v637 = vpack.c.b16 %v533, %v531
    %v638 = vpack.c.b16 %v536, %v534
    %v639 = vpack.c.b16 %v537, %v535
    %v640 = vpack.c.b16 %v540, %v538
    %v641 = vpack.c.b16 %v541, %v539
    %v642 = vpack.c.b16 %v544, %v542
    %v643 = vpack.c.b16 %v545, %v543
    %vm742 = vcmask 130048
    %v744 = vsel %vm742, %v112, 0
    %v747 = vsel %vm742, %v119, 0
    %v750 = vsel %vm742, %v126, 0
    %v753 = vsel %vm742, %v133, 0
    %755 = vmatprep.subr.bf16.mxu0 %v547
    %756 = vmatpush1.bf16.msra.mxu0 %v546
    %757 = vmatprep.subr.bf16.mxu0 %v549
    %758 = vmatpush1.bf16.msra.mxu0 %v548
    %759 = vmatprep.subr.bf16.mxu0 %v551
    %760 = vmatpush1.bf16.msra.mxu0 %v550
    %761 = vmatprep.subr.bf16.mxu0 %v553
    %762 = vmatpush1.bf16.msra.mxu0 %v552
    %763 = vmatprep.subr.bf16.mxu0 %v555
    %764 = vmatpush1.bf16.msra.mxu0 %v554
    %765 = vmatprep.subr.bf16.mxu0 %v557
    %766 = vmatpush1.bf16.msra.mxu0 %v556
    %767 = vmatprep.subr.bf16.mxu0 %v559
    %768 = vmatpush1.bf16.msra.mxu0 %v558
    %769 = vmatprep.subr.bf16.mxu0 %v561
    %770 = vmatpush1.bf16.msra.mxu0 %v560
    %771 = vmatprep.subr.bf16.mxu0 %v563
    %772 = vmatpush1.bf16.msra.mxu0 %v562
    %773 = vmatprep.subr.bf16.mxu0 %v565
    %774 = vmatpush1.bf16.msra.mxu0 %v564
    %775 = vmatprep.subr.bf16.mxu0 %v567
    %776 = vmatpush1.bf16.msra.mxu0 %v566
    %777 = vmatprep.subr.bf16.mxu0 %v569
    %778 = vmatpush1.bf16.msra.mxu0 %v568
    %779 = vmatprep.subr.bf16.mxu0 %v571
    %780 = vmatpush1.bf16.msra.mxu0 %v570
    %781 = vmatprep.subr.bf16.mxu0 %v573
    %782 = vmatpush1.bf16.msra.mxu0 %v572
    %783 = vmatprep.subr.bf16.mxu0 %v575
    %784 = vmatpush1.bf16.msra.mxu0 %v574
    %785 = vmatprep.subr.bf16.mxu0 %v577
    %786 = vmatpush1.bf16.msra.mxu0 %v576
    %787 = vmatprep.mubr.bf16.mxu0 %v107
    %788 = vmatmul.mubr.bf16.gmra.mrb[0].mxu0 %v106
    %v789 = vpop.f32.mrb[0].mxu0
    %v790 = vadd.f32 %v247, %v789
    %v791 = vpop.f32.mrb[0].mxu0
    %v792 = vadd.f32 %v251, %v791
    %v793 = vpop.f32.mrb[0].mxu0
    %v794 = vadd.f32 %v247, %v793
    %v795 = vpop.f32.mrb[0].mxu0
    %v796 = vadd.f32 %v251, %v795
    %797 = vmatprep.mubr.bf16.mxu0 %v114
    %798 = vmatmul.mubr.bf16.gmra.mrb[0].mxu0 %v113
    %v799 = vpop.f32.mrb[0].mxu0
    %v800 = vadd.f32 %v247, %v799
    %v801 = vpop.f32.mrb[0].mxu0
    %v802 = vadd.f32 %v251, %v801
    %v803 = vpop.f32.mrb[0].mxu0
    %v804 = vadd.f32 %v247, %v803
    %v805 = vpop.f32.mrb[0].mxu0
    %v806 = vadd.f32 %v251, %v805
    %807 = vmatprep.mubr.bf16.mxu0 %v121
    %808 = vmatmul.mubr.bf16.gmra.mrb[0].mxu0 %v120
    %v809 = vpop.f32.mrb[0].mxu0
    %v810 = vadd.f32 %v247, %v809
    %v811 = vpop.f32.mrb[0].mxu0
    %v812 = vadd.f32 %v251, %v811
    %v813 = vpop.f32.mrb[0].mxu0
    %v814 = vadd.f32 %v247, %v813
    %v815 = vpop.f32.mrb[0].mxu0
    %v816 = vadd.f32 %v251, %v815
    %817 = vmatprep.mubr.bf16.mxu0 %v128
    %818 = vmatmul.mubr.bf16.gmra.mrb[0].mxu0 %v127
    %v819 = vpop.f32.mrb[0].mxu0
    %v820 = vadd.f32 %v247, %v819
    %v821 = vpop.f32.mrb[0].mxu0
    %v822 = vadd.f32 %v251, %v821
    %v823 = vpop.f32.mrb[0].mxu0
    %v824 = vadd.f32 %v247, %v823
    %v825 = vpop.f32.mrb[0].mxu0
    %v826 = vadd.f32 %v251, %v825
    %827 = vdwg.mxu0
    %828 = vmatprep.subr.bf16.mxu0 %v579
    %829 = vmatpush1.bf16.msra.mxu0 %v578
    %830 = vmatprep.subr.bf16.mxu0 %v581
    %831 = vmatpush1.bf16.msra.mxu0 %v580
    %832 = vmatprep.subr.bf16.mxu0 %v583
    %833 = vmatpush1.bf16.msra.mxu0 %v582
    %834 = vmatprep.subr.bf16.mxu0 %v585
    %835 = vmatpush1.bf16.msra.mxu0 %v584
    %836 = vmatprep.subr.bf16.mxu0 %v587
    %837 = vmatpush1.bf16.msra.mxu0 %v586
    %838 = vmatprep.subr.bf16.mxu0 %v589
    %839 = vmatpush1.bf16.msra.mxu0 %v588
    %840 = vmatprep.subr.bf16.mxu0 %v591
    %841 = vmatpush1.bf16.msra.mxu0 %v590
    %842 = vmatprep.subr.bf16.mxu0 %v593
    %843 = vmatpush1.bf16.msra.mxu0 %v592
    %844 = vmatprep.subr.bf16.mxu0 %v595
    %845 = vmatpush1.bf16.msra.mxu0 %v594
    %846 = vmatprep.subr.bf16.mxu0 %v597
    %847 = vmatpush1.bf16.msra.mxu0 %v596
    %848 = vmatprep.subr.bf16.mxu0 %v599
    %849 = vmatpush1.bf16.msra.mxu0 %v598
    %850 = vmatprep.subr.bf16.mxu0 %v601
    %851 = vmatpush1.bf16.msra.mxu0 %v600
    %852 = vmatprep.subr.bf16.mxu0 %v603
    %853 = vmatpush1.bf16.msra.mxu0 %v602
    %854 = vmatprep.subr.bf16.mxu0 %v605
    %855 = vmatpush1.bf16.msra.mxu0 %v604
    %856 = vmatprep.subr.bf16.mxu0 %v607
    %857 = vmatpush1.bf16.msra.mxu0 %v606
    %858 = vmatprep.subr.bf16.mxu0 %v609
    %859 = vmatpush1.bf16.msra.mxu0 %v608
    %860 = vmatprep.mubr.bf16.mxu0 %v109
    %861 = vmatmul.mubr.bf16.gmra.mrb[0].mxu0 %v108
    %v862 = vpop.f32.mrb[0].mxu0
    %v863 = vadd.f32 %v790, %v862
    %v864 = vpop.f32.mrb[0].mxu0
    %v865 = vadd.f32 %v792, %v864
    %v866 = vpop.f32.mrb[0].mxu0
    %v867 = vadd.f32 %v794, %v866
    %v868 = vpop.f32.mrb[0].mxu0
    %v869 = vadd.f32 %v796, %v868
    %870 = vmatprep.mubr.bf16.mxu0 %v116
    %871 = vmatmul.mubr.bf16.gmra.mrb[0].mxu0 %v115
    %v872 = vpop.f32.mrb[0].mxu0
    %v873 = vadd.f32 %v800, %v872
    %v874 = vpop.f32.mrb[0].mxu0
    %v875 = vadd.f32 %v802, %v874
    %v876 = vpop.f32.mrb[0].mxu0
    %v877 = vadd.f32 %v804, %v876
    %v878 = vpop.f32.mrb[0].mxu0
    %v879 = vadd.f32 %v806, %v878
    %880 = vmatprep.mubr.bf16.mxu0 %v123
    %881 = vmatmul.mubr.bf16.gmra.mrb[0].mxu0 %v122
    %v882 = vpop.f32.mrb[0].mxu0
    %v883 = vadd.f32 %v810, %v882
    %v884 = vpop.f32.mrb[0].mxu0
    %v885 = vadd.f32 %v812, %v884
    %v886 = vpop.f32.mrb[0].mxu0
    %v887 = vadd.f32 %v814, %v886
    %v888 = vpop.f32.mrb[0].mxu0
    %v889 = vadd.f32 %v816, %v888
    %890 = vmatprep.mubr.bf16.mxu0 %v130
    %891 = vmatmul.mubr.bf16.gmra.mrb[0].mxu0 %v129
    %v892 = vpop.f32.mrb[0].mxu0
    %v893 = vadd.f32 %v820, %v892
    %v894 = vpop.f32.mrb[0].mxu0
    %v895 = vadd.f32 %v822, %v894
    %v896 = vpop.f32.mrb[0].mxu0
    %v897 = vadd.f32 %v824, %v896
    %v898 = vpop.f32.mrb[0].mxu0
    %v899 = vadd.f32 %v826, %v898
    %900 = vdwg.mxu0
    %901 = vmatprep.subr.bf16.mxu0 %v611
    %902 = vmatpush1.bf16.msra.mxu0 %v610
    %903 = vmatprep.subr.bf16.mxu0 %v613
    %904 = vmatpush1.bf16.msra.mxu0 %v612
    %905 = vmatprep.subr.bf16.mxu0 %v615
    %906 = vmatpush1.bf16.msra.mxu0 %v614
    %907 = vmatprep.subr.bf16.mxu0 %v617
    %908 = vmatpush1.bf16.msra.mxu0 %v616
    %909 = vmatprep.subr.bf16.mxu0 %v619
    %910 = vmatpush1.bf16.msra.mxu0 %v618
    %911 = vmatprep.subr.bf16.mxu0 %v621
    %912 = vmatpush1.bf16.msra.mxu0 %v620
    %913 = vmatprep.subr.bf16.mxu0 %v623
    %914 = vmatpush1.bf16.msra.mxu0 %v622
    %915 = vmatprep.subr.bf16.mxu0 %v625
    %916 = vmatpush1.bf16.msra.mxu0 %v624
    %917 = vmatprep.subr.bf16.mxu0 %v627
    %918 = vmatpush1.bf16.msra.mxu0 %v626
    %919 = vmatprep.subr.bf16.mxu0 %v629
    %920 = vmatpush1.bf16.msra.mxu0 %v628
    %921 = vmatprep.subr.bf16.mxu0 %v631
    %922 = vmatpush1.bf16.msra.mxu0 %v630
    %923 = vmatprep.subr.bf16.mxu0 %v633
    %924 = vmatpush1.bf16.msra.mxu0 %v632
    %925 = vmatprep.subr.bf16.mxu0 %v635
    %926 = vmatpush1.bf16.msra.mxu0 %v634
    %927 = vmatprep.subr.bf16.mxu0 %v637
    %928 = vmatpush1.bf16.msra.mxu0 %v636
    %929 = vmatprep.subr.bf16.mxu0 %v639
    %930 = vmatpush1.bf16.msra.mxu0 %v638
    %931 = vmatprep.subr.bf16.mxu0 %v641
    %932 = vmatpush1.bf16.msra.mxu0 %v640
    %933 = vmatprep.mubr.bf16.mxu0 %v111
    %934 = vmatmul.mubr.bf16.gmra.mrb[0].mxu0 %v110
    %v935 = vpop.f32.mrb[0].mxu0
    %v936 = vadd.f32 %v863, %v935
    %v937 = vpop.f32.mrb[0].mxu0
    %v938 = vadd.f32 %v865, %v937
    %v939 = vpop.f32.mrb[0].mxu0
    %v940 = vadd.f32 %v867, %v939
    %v941 = vpop.f32.mrb[0].mxu0
    %v942 = vadd.f32 %v869, %v941
    %943 = vmatprep.mubr.bf16.mxu0 %v118
    %944 = vmatmul.mubr.bf16.gmra.mrb[0].mxu0 %v117
    %v945 = vpop.f32.mrb[0].mxu0
    %v946 = vadd.f32 %v873, %v945
    %v947 = vpop.f32.mrb[0].mxu0
    %v948 = vadd.f32 %v875, %v947
    %v949 = vpop.f32.mrb[0].mxu0
    %v950 = vadd.f32 %v877, %v949
    %v951 = vpop.f32.mrb[0].mxu0
    %v952 = vadd.f32 %v879, %v951
    %953 = vmatprep.mubr.bf16.mxu0 %v125
    %954 = vmatmul.mubr.bf16.gmra.mrb[0].mxu0 %v124
    %v955 = vpop.f32.mrb[0].mxu0
    %v956 = vadd.f32 %v883, %v955
    %v957 = vpop.f32.mrb[0].mxu0
    %v958 = vadd.f32 %v885, %v957
    %v959 = vpop.f32.mrb[0].mxu0
    %v960 = vadd.f32 %v887, %v959
    %v961 = vpop.f32.mrb[0].mxu0
    %v962 = vadd.f32 %v889, %v961
    %963 = vmatprep.mubr.bf16.mxu0 %v132
    %964 = vmatmul.mubr.bf16.gmra.mrb[0].mxu0 %v131
    %v965 = vpop.f32.mrb[0].mxu0
    %v966 = vadd.f32 %v893, %v965
    %v967 = vpop.f32.mrb[0].mxu0
    %v968 = vadd.f32 %v895, %v967
    %v969 = vpop.f32.mrb[0].mxu0
    %v970 = vadd.f32 %v897, %v969
    %v971 = vpop.f32.mrb[0].mxu0
    %v972 = vadd.f32 %v899, %v971
    %973 = vdwg.mxu0
    %974 = vmatprep.subr.bf16.mxu0 %v643
    %975 = vmatpush1.bf16.msra.mxu0 %v642
    %976 = vmatprep.subr.bf16.mxu0 0
    %977 = vmatpush1.bf16.msra.mxu0 0
    %978 = vmatprep.subr.bf16.mxu0 0
    %979 = vmatpush1.bf16.msra.mxu0 0
    %980 = vmatprep.subr.bf16.mxu0 0
    %981 = vmatpush1.bf16.msra.mxu0 0
    %982 = vmatprep.subr.bf16.mxu0 0
    %983 = vmatpush1.bf16.msra.mxu0 0
    %984 = vmatprep.subr.bf16.mxu0 0
    %985 = vmatpush1.bf16.msra.mxu0 0
    %986 = vmatprep.subr.bf16.mxu0 0
    %987 = vmatpush1.bf16.msra.mxu0 0
    %988 = vmatprep.subr.bf16.mxu0 0
    %989 = vmatpush1.bf16.msra.mxu0 0
    %990 = vmatprep.subr.bf16.mxu0 0
    %991 = vmatpush1.bf16.msra.mxu0 0
    %992 = vmatprep.subr.bf16.mxu0 0
    %993 = vmatpush1.bf16.msra.mxu0 0
    %994 = vmatprep.subr.bf16.mxu0 0
    %995 = vmatpush1.bf16.msra.mxu0 0
    %996 = vmatprep.subr.bf16.mxu0 0
    %997 = vmatpush1.bf16.msra.mxu0 0
    %998 = vmatprep.subr.bf16.mxu0 0
    %999 = vmatpush1.bf16.msra.mxu0 0
    %1000 = vmatprep.subr.bf16.mxu0 0
    %1001 = vmatpush1.bf16.msra.mxu0 0
    %1002 = vmatprep.subr.bf16.mxu0 0
    %1003 = vmatpush1.bf16.msra.mxu0 0
    %1004 = vmatprep.subr.bf16.mxu0 0
    %1005 = vmatpush1.bf16.msra.mxu0 0
    %1006 = vmatprep.mubr.bf16.mxu0 0
    %1007 = vmatmul.mubr.bf16.gmra.mrb[0].mxu0 %v744
    %v1008 = vpop.f32.mrb[0].mxu0
    %v1009 = vadd.f32 %v936, %v1008
    %v1010 = vpop.f32.mrb[0].mxu0
    %v1011 = vadd.f32 %v938, %v1010
    %v1012 = vpop.f32.mrb[0].mxu0
    %v1013 = vadd.f32 %v940, %v1012
    %v1014 = vpop.f32.mrb[0].mxu0
    %v1015 = vadd.f32 %v942, %v1014
    %1016 = vmatprep.mubr.bf16.mxu0 0
    %1017 = vmatmul.mubr.bf16.gmra.mrb[0].mxu0 %v747
    %v1018 = vpop.f32.mrb[0].mxu0
    %v1019 = vadd.f32 %v946, %v1018
    %v1020 = vpop.f32.mrb[0].mxu0
    %v1021 = vadd.f32 %v948, %v1020
    %v1022 = vpop.f32.mrb[0].mxu0
    %v1023 = vadd.f32 %v950, %v1022
    %v1024 = vpop.f32.mrb[0].mxu0
    %v1025 = vadd.f32 %v952, %v1024
    %1026 = vmatprep.mubr.bf16.mxu0 0
    %1027 = vmatmul.mubr.bf16.gmra.mrb[0].mxu0 %v750
    %v1028 = vpop.f32.mrb[0].mxu0
    %v1029 = vadd.f32 %v956, %v1028
    %v1030 = vpop.f32.mrb[0].mxu0
    %v1031 = vadd.f32 %v958, %v1030
    %v1032 = vpop.f32.mrb[0].mxu0
    %v1033 = vadd.f32 %v960, %v1032
    %v1034 = vpop.f32.mrb[0].mxu0
    %v1035 = vadd.f32 %v962, %v1034
    %1036 = vmatprep.mubr.bf16.mxu0 0
    %1037 = vmatmul.mubr.bf16.gmra.mrb[0].mxu0 %v753
    %v1038 = vpop.f32.mrb[0].mxu0
    %v1039 = vadd.f32 %v966, %v1038
    %v1040 = vpop.f32.mrb[0].mxu0
    %v1041 = vadd.f32 %v968, %v1040
    %v1042 = vpop.f32.mrb[0].mxu0
    %v1043 = vadd.f32 %v970, %v1042
    %v1044 = vpop.f32.mrb[0].mxu0
    %v1045 = vadd.f32 %v972, %v1044
    %1046 = vdwg.mxu0
    %v1047 = vxor.u32 %v1009, 2147483648
    %v1048 = vxor.u32 %v1011, 2147483648
    %v1049 = vxor.u32 %v1013, 2147483648
    %v1050 = vxor.u32 %v1015, 2147483648
    %v1051 = vxor.u32 %v1019, 2147483648
    %v1052 = vxor.u32 %v1021, 2147483648
    %v1053 = vxor.u32 %v1023, 2147483648
    %v1054 = vxor.u32 %v1025, 2147483648
    %v1055 = vxor.u32 %v1029, 2147483648
    %v1056 = vxor.u32 %v1031, 2147483648
    %v1057 = vxor.u32 %v1033, 2147483648
    %v1058 = vxor.u32 %v1035, 2147483648
    %v1059 = vxor.u32 %v1039, 2147483648
    %v1060 = vxor.u32 %v1041, 2147483648
    %v1061 = vxor.u32 %v1043, 2147483648
    %v1062 = vxor.u32 %v1045, 2147483648
    %v1063 = vmul.f32 %v1047, 1.442695
    %v1064 = vpow.pop %v1063
    %v1065 = vmul.f32 %v1048, 1.442695
    %v1066 = vpow.pop %v1065
    %v1067 = vmul.f32 %v1049, 1.442695
    %v1068 = vpow.pop %v1067
    %v1069 = vmul.f32 %v1050, 1.442695
    %v1070 = vpow.pop %v1069
    %v1071 = vmul.f32 %v1051, 1.442695
    %v1072 = vpow.pop %v1071
    %v1073 = vmul.f32 %v1052, 1.442695
    %v1074 = vpow.pop %v1073
    %v1075 = vmul.f32 %v1053, 1.442695
    %v1076 = vpow.pop %v1075
    %v1077 = vmul.f32 %v1054, 1.442695
    %v1078 = vpow.pop %v1077
    %v1079 = vmul.f32 %v1055, 1.442695
    %v1080 = vpow.pop %v1079
    %v1081 = vmul.f32 %v1056, 1.442695
    %v1082 = vpow.pop %v1081
    %v1083 = vmul.f32 %v1057, 1.442695
    %v1084 = vpow.pop %v1083
    %v1085 = vmul.f32 %v1058, 1.442695
    %v1086 = vpow.pop %v1085
    %v1087 = vmul.f32 %v1059, 1.442695
    %v1088 = vpow.pop %v1087
    %v1089 = vmul.f32 %v1060, 1.442695
    %v1090 = vpow.pop %v1089
    %v1091 = vmul.f32 %v1061, 1.442695
    %v1092 = vpow.pop %v1091
    %v1093 = vmul.f32 %v1062, 1.442695
    %v1094 = vpow.pop %v1093
    %v1095 = vadd.f32 %v1064, 1.0
    %v1096 = vadd.f32 %v1066, 1.0
    %v1097 = vadd.f32 %v1068, 1.0
    %v1098 = vadd.f32 %v1070, 1.0
    %v1099 = vadd.f32 %v1072, 1.0
    %v1100 = vadd.f32 %v1074, 1.0
    %v1101 = vadd.f32 %v1076, 1.0
    %v1102 = vadd.f32 %v1078, 1.0
    %v1103 = vadd.f32 %v1080, 1.0
    %v1104 = vadd.f32 %v1082, 1.0
    %v1105 = vadd.f32 %v1084, 1.0
    %v1106 = vadd.f32 %v1086, 1.0
    %v1107 = vadd.f32 %v1088, 1.0
    %v1108 = vadd.f32 %v1090, 1.0
    %v1109 = vadd.f32 %v1092, 1.0
    %v1110 = vadd.f32 %v1094, 1.0
    %v1111 = vrcp.pop %v1095
    %v1112 = vmul.f32 1.0, %v1111
    %v1113 = vrcp.pop %v1096
    %v1114 = vmul.f32 1.0, %v1113
    %v1115 = vrcp.pop %v1097
    %v1116 = vmul.f32 1.0, %v1115
    %v1117 = vrcp.pop %v1098
    %v1118 = vmul.f32 1.0, %v1117
    %v1119 = vrcp.pop %v1099
    %v1120 = vmul.f32 1.0, %v1119
    %v1121 = vrcp.pop %v1100
    %v1122 = vmul.f32 1.0, %v1121
    %v1123 = vrcp.pop %v1101
    %v1124 = vmul.f32 1.0, %v1123
    %v1125 = vrcp.pop %v1102
    %v1126 = vmul.f32 1.0, %v1125
    %v1127 = vrcp.pop %v1103
    %v1128 = vmul.f32 1.0, %v1127
    %v1129 = vrcp.pop %v1104
    %v1130 = vmul.f32 1.0, %v1129
    %v1131 = vrcp.pop %v1105
    %v1132 = vmul.f32 1.0, %v1131
    %v1133 = vrcp.pop %v1106
    %v1134 = vmul.f32 1.0, %v1133
    %v1135 = vrcp.pop %v1107
    %v1136 = vmul.f32 1.0, %v1135
    %v1137 = vrcp.pop %v1108
    %v1138 = vmul.f32 1.0, %v1137
    %v1139 = vrcp.pop %v1109
    %v1140 = vmul.f32 1.0, %v1139
    %v1141 = vrcp.pop %v1110
    %v1142 = vmul.f32 1.0, %v1141
    %v1143 = vpack.c.bf16 %v1116, %v1112
    %v1144 = vpack.c.bf16 %v1118, %v1114
    %v1145 = vpack.c.bf16 %v1124, %v1120
    %v1146 = vpack.c.bf16 %v1126, %v1122
    %v1147 = vpack.c.bf16 %v1132, %v1128
    %v1148 = vpack.c.bf16 %v1134, %v1130
    %v1149 = vpack.c.bf16 %v1140, %v1136
    %v1150 = vpack.c.bf16 %v1142, %v1138
    %v1151 = vld [vmem:[%s2] sm:$0xf]
    %v1152 = vld [vmem:[%s2 + $0x4] sm:$0xf]
    %v1153 = vld [vmem:[%s2 + $0x8] sm:$0xf]
    %v1154 = vld [vmem:[%s2 + $0xc] sm:$0xf]
    %v1155 = vld [vmem:[%s2 + $0x10] sm:$0xf]
    %v1156 = vld [vmem:[%s2 + $0x14] sm:$0xf]
    %v1157 = vld [vmem:[%s2 + $0x18] sm:$0xf]
    %v1158 = vld [vmem:[%s2 + $0x1c] sm:$0xf]
    %v1159 = vld [vmem:[%s2 + $0x20] sm:$0xf]
    %v1160 = vld [vmem:[%s2 + $0x24] sm:$0xf]
    %v1161 = vld [vmem:[%s2 + $0x28] sm:$0xf]
    %v1162 = vld [vmem:[%s2 + $0x2c] sm:$0xf]
    %v1163 = vld [vmem:[%s2 + $0x30] sm:$0xf]
    %v1164 = vld [vmem:[%s2 + $0x34] sm:$0xf]
    %v1165 = vld [vmem:[%s2 + $0x38] sm:$0xf]
    %v1166 = vld [vmem:[%s2 + $0x3c] sm:$0xf]
    %v1167 = vld [vmem:[%s2 + $0x40] sm:$0xf]
    %v1168 = vld [vmem:[%s2 + $0x44] sm:$0xf]
    %v1169 = vld [vmem:[%s2 + $0x48] sm:$0xf]
    %v1170 = vld [vmem:[%s2 + $0x4c] sm:$0xf]
    %v1171 = vld [vmem:[%s2 + $0x50] sm:$0xf]
    %v1172 = vld [vmem:[%s2 + $0x54] sm:$0xf]
    %v1173 = vld [vmem:[%s2 + $0x58] sm:$0xf]
    %v1174 = vld [vmem:[%s2 + $0x5c] sm:$0xf]
    %v1175 = vld [vmem:[%s2 + $0x60] sm:$0xf]
    %v1176 = vld [vmem:[%s2 + $0x64] sm:$0xf]
    %v1177 = vld [vmem:[%s2 + $0x68] sm:$0xf]
    %v1178 = vld [vmem:[%s2 + $0x6c] sm:$0xf]
    %v1179 = vld [vmem:[%s2 + $0x70] sm:$0xf]
    %v1180 = vld [vmem:[%s2 + $0x74] sm:$0xf]
    %v1181 = vld [vmem:[%s2 + $0x78] sm:$0xf]
    %v1182 = vld [vmem:[%s2 + $0x7c] sm:$0xf]
    %v1183 = vlaneseq
    %v1184 = vshrl.u32 %v1183, 7
    %v1185 = vsub.s32 1, %v1184
    %v1186 = vrot.slane %v134, %v1185
    %v1219 = vunpack.c.l.b16 %v1151
    %v1220 = vunpack.c.l.b16 %v1152
    %v1221 = vunpack.c.l.b16 %v1153
    %v1222 = vunpack.c.l.b16 %v1154
    %v1223 = vunpack.c.l.b16 %v1155
    %v1224 = vunpack.c.l.b16 %v1156
    %v1225 = vunpack.c.l.b16 %v1157
    %v1226 = vunpack.c.l.b16 %v1158
    %v1227 = vunpack.c.l.b16 %v1159
    %v1228 = vunpack.c.l.b16 %v1160
    %v1229 = vunpack.c.l.b16 %v1161
    %v1230 = vunpack.c.l.b16 %v1162
    %v1231 = vunpack.c.l.b16 %v1163
    %v1232 = vunpack.c.l.b16 %v1164
    %v1233 = vunpack.c.l.b16 %v1165
    %v1234 = vunpack.c.l.b16 %v1166
    %v1235 = vunpack.c.l.b16 %v1167
    %v1236 = vunpack.c.l.b16 %v1168
    %v1237 = vunpack.c.l.b16 %v1169
    %v1238 = vunpack.c.l.b16 %v1170
    %v1239 = vunpack.c.l.b16 %v1171
    %v1240 = vunpack.c.l.b16 %v1172
    %v1241 = vunpack.c.l.b16 %v1173
    %v1242 = vunpack.c.l.b16 %v1174
    %v1243 = vunpack.c.l.b16 %v1175
    %v1244 = vunpack.c.l.b16 %v1176
    %v1245 = vunpack.c.l.b16 %v1177
    %v1246 = vunpack.c.l.b16 %v1178
    %v1247 = vunpack.c.l.b16 %v1179
    %v1248 = vunpack.c.l.b16 %v1180
    %v1249 = vunpack.c.l.b16 %v1181
    %v1250 = vunpack.c.l.b16 %v1182
    %v1251 = vpack.c.b16 %v1220, %v1219
    %v1252 = vpack.c.b16 %v1222, %v1221
    %v1253 = vpack.c.b16 %v1224, %v1223
    %v1254 = vpack.c.b16 %v1226, %v1225
    %v1255 = vpack.c.b16 %v1228, %v1227
    %v1256 = vpack.c.b16 %v1230, %v1229
    %v1257 = vpack.c.b16 %v1232, %v1231
    %v1258 = vpack.c.b16 %v1234, %v1233
    %v1259 = vpack.c.b16 %v1236, %v1235
    %v1260 = vpack.c.b16 %v1238, %v1237
    %v1261 = vpack.c.b16 %v1240, %v1239
    %v1262 = vpack.c.b16 %v1242, %v1241
    %v1263 = vpack.c.b16 %v1244, %v1243
    %v1264 = vpack.c.b16 %v1246, %v1245
    %v1265 = vpack.c.b16 %v1248, %v1247
    %v1266 = vpack.c.b16 %v1250, %v1249
    %1283 = vmatprep.subr.bf16.mxu0 0
    %1284 = vmatpush1.bf16.msra.mxu0 %v1251
    %1285 = vmatprep.subr.bf16.mxu0 0
    %1286 = vmatpush1.bf16.msra.mxu0 %v1252
    %1287 = vmatprep.subr.bf16.mxu0 0
    %1288 = vmatpush1.bf16.msra.mxu0 %v1253
    %1289 = vmatprep.subr.bf16.mxu0 0
    %1290 = vmatpush1.bf16.msra.mxu0 %v1254
    %1291 = vmatprep.subr.bf16.mxu0 0
    %1292 = vmatpush1.bf16.msra.mxu0 %v1255
    %1293 = vmatprep.subr.bf16.mxu0 0
    %1294 = vmatpush1.bf16.msra.mxu0 %v1256
    %1295 = vmatprep.subr.bf16.mxu0 0
    %1296 = vmatpush1.bf16.msra.mxu0 %v1257
    %1297 = vmatprep.subr.bf16.mxu0 0
    %1298 = vmatpush1.bf16.msra.mxu0 %v1258
    %1299 = vmatprep.subr.bf16.mxu0 0
    %1300 = vmatpush1.bf16.msra.mxu0 %v1259
    %1301 = vmatprep.subr.bf16.mxu0 0
    %1302 = vmatpush1.bf16.msra.mxu0 %v1260
    %1303 = vmatprep.subr.bf16.mxu0 0
    %1304 = vmatpush1.bf16.msra.mxu0 %v1261
    %1305 = vmatprep.subr.bf16.mxu0 0
    %1306 = vmatpush1.bf16.msra.mxu0 %v1262
    %1307 = vmatprep.subr.bf16.mxu0 0
    %1308 = vmatpush1.bf16.msra.mxu0 %v1263
    %1309 = vmatprep.subr.bf16.mxu0 0
    %1310 = vmatpush1.bf16.msra.mxu0 %v1264
    %1311 = vmatprep.subr.bf16.mxu0 0
    %1312 = vmatpush1.bf16.msra.mxu0 %v1265
    %1313 = vmatprep.subr.bf16.mxu0 0
    %1314 = vmatpush1.bf16.msra.mxu0 %v1266
    %1315 = vmatprep.mubr.bf16.mxu0 %v1144
    %1316 = vmatmul.mubr.bf16.gmra.mrb[0].mxu0 %v1143
    %v1317 = vpop.f32.mrb[0].mxu0
    %v1318 = vadd.f32 %v1186, %v1317
    %v1319 = vpop.f32.mrb[0].mxu0
    %v1320 = vpop.f32.mrb[0].mxu0
    %v1321 = vadd.f32 %v1186, %v1320
    %v1322 = vpop.f32.mrb[0].mxu0
    %1323 = vmatprep.mubr.bf16.mxu0 %v1146
    %1324 = vmatmul.mubr.bf16.gmra.mrb[0].mxu0 %v1145
    %v1325 = vpop.f32.mrb[0].mxu0
    %v1326 = vadd.f32 %v1186, %v1325
    %v1327 = vpop.f32.mrb[0].mxu0
    %v1328 = vpop.f32.mrb[0].mxu0
    %v1329 = vadd.f32 %v1186, %v1328
    %v1330 = vpop.f32.mrb[0].mxu0
    %1331 = vmatprep.mubr.bf16.mxu0 %v1148
    %1332 = vmatmul.mubr.bf16.gmra.mrb[0].mxu0 %v1147
    %v1333 = vpop.f32.mrb[0].mxu0
    %v1334 = vadd.f32 %v1186, %v1333
    %v1335 = vpop.f32.mrb[0].mxu0
    %v1336 = vpop.f32.mrb[0].mxu0
    %v1337 = vadd.f32 %v1186, %v1336
    %v1338 = vpop.f32.mrb[0].mxu0
    %1339 = vmatprep.mubr.bf16.mxu0 %v1150
    %1340 = vmatmul.mubr.bf16.gmra.mrb[0].mxu0 %v1149
    %v1341 = vpop.f32.mrb[0].mxu0
    %v1342 = vadd.f32 %v1186, %v1341
    %v1343 = vpop.f32.mrb[0].mxu0
    %v1344 = vpop.f32.mrb[0].mxu0
    %v1345 = vadd.f32 %v1186, %v1344
    %v1346 = vpop.f32.mrb[0].mxu0
    %1347 = vdwg.mxu0
    %v1348 = vxor.u32 %v1318, 2147483648
    %v1349 = vxor.u32 %v1321, 2147483648
    %v1350 = vxor.u32 %v1326, 2147483648
    %v1351 = vxor.u32 %v1329, 2147483648
    %v1352 = vxor.u32 %v1334, 2147483648
    %v1353 = vxor.u32 %v1337, 2147483648
    %v1354 = vxor.u32 %v1342, 2147483648
    %v1355 = vxor.u32 %v1345, 2147483648
    %v1356 = vmul.f32 %v1348, 1.442695
    %v1357 = vpow.pop %v1356
    %v1358 = vmul.f32 %v1349, 1.442695
    %v1359 = vpow.pop %v1358
    %v1360 = vmul.f32 %v1350, 1.442695
    %v1361 = vpow.pop %v1360
    %v1362 = vmul.f32 %v1351, 1.442695
    %v1363 = vpow.pop %v1362
    %v1364 = vmul.f32 %v1352, 1.442695
    %v1365 = vpow.pop %v1364
    %v1366 = vmul.f32 %v1353, 1.442695
    %v1367 = vpow.pop %v1366
    %v1368 = vmul.f32 %v1354, 1.442695
    %v1369 = vpow.pop %v1368
    %v1370 = vmul.f32 %v1355, 1.442695
    %v1371 = vpow.pop %v1370
    %v1372 = vadd.f32 %v1357, 1.0
    %v1373 = vadd.f32 %v1359, 1.0
    %v1374 = vadd.f32 %v1361, 1.0
    %v1375 = vadd.f32 %v1363, 1.0
    %v1376 = vadd.f32 %v1365, 1.0
    %v1377 = vadd.f32 %v1367, 1.0
    %v1378 = vadd.f32 %v1369, 1.0
    %v1379 = vadd.f32 %v1371, 1.0
    %v1380 = vrcp.pop %v1372
    %v1381 = vmul.f32 1.0, %v1380
    %v1382 = vrcp.pop %v1373
    %v1383 = vmul.f32 1.0, %v1382
    %v1384 = vrcp.pop %v1374
    %v1385 = vmul.f32 1.0, %v1384
    %v1386 = vrcp.pop %v1375
    %v1387 = vmul.f32 1.0, %v1386
    %v1388 = vrcp.pop %v1376
    %v1389 = vmul.f32 1.0, %v1388
    %v1390 = vrcp.pop %v1377
    %v1391 = vmul.f32 1.0, %v1390
    %v1392 = vrcp.pop %v1378
    %v1393 = vmul.f32 1.0, %v1392
    %v1394 = vrcp.pop %v1379
    %v1395 = vmul.f32 1.0, %v1394
    %v1396 = vpack.c.bf16 %v1383, %v1381
    %v1397 = vpack.c.bf16 %v1387, %v1385
    %v1398 = vpack.c.bf16 %v1391, %v1389
    %v1399 = vpack.c.bf16 %v1395, %v1393
    %v1400 = vld [vmem:[%s3] sm:$0xf]
    %v1401 = vld [vmem:[%s3 + $0x4] sm:$0xf]
    %v1402 = vld [vmem:[%s3 + $0x8] sm:$0xf]
    %v1403 = vld [vmem:[%s3 + $0xc] sm:$0xf]
    %v1404 = vld [vmem:[%s3 + $0x10] sm:$0xf]
    %v1405 = vld [vmem:[%s3 + $0x14] sm:$0xf]
    %v1406 = vld [vmem:[%s3 + $0x18] sm:$0xf]
    %v1407 = vld [vmem:[%s3 + $0x1c] sm:$0xf]
    %v1408 = vlaneseq
    %v1409 = vshrl.u32 %v1408, 7
    %v1410 = vsub.s32 2, %v1409
    %v1411 = vrot.slane %v134, %v1410
    %v1420 = vunpack.c.l.b16 %v1400
    %v1421 = vunpack.c.l.b16 %v1401
    %v1422 = vunpack.c.l.b16 %v1402
    %v1423 = vunpack.c.l.b16 %v1403
    %v1424 = vunpack.c.l.b16 %v1404
    %v1425 = vunpack.c.l.b16 %v1405
    %v1426 = vunpack.c.l.b16 %v1406
    %v1427 = vunpack.c.l.b16 %v1407
    %v1428 = vpack.c.b16 %v1421, %v1420
    %v1429 = vpack.c.b16 %v1423, %v1422
    %v1430 = vpack.c.b16 %v1425, %v1424
    %v1431 = vpack.c.b16 %v1427, %v1426
    %vm1436 = vcmask 523264
    %v1438 = vsel %vm1436, %v1396, 0
    %v1441 = vsel %vm1436, %v1397, 0
    %v1444 = vsel %vm1436, %v1398, 0
    %v1447 = vsel %vm1436, %v1399, 0
    %1449 = vmatprep.subr.bf16.mxu0 0
    %1450 = vmatpush1.bf16.msra.mxu0 %v1428
    %1451 = vmatprep.subr.bf16.mxu0 0
    %1452 = vmatpush1.bf16.msra.mxu0 %v1429
    %1453 = vmatprep.subr.bf16.mxu0 0
    %1454 = vmatpush1.bf16.msra.mxu0 %v1430
    %1455 = vmatprep.subr.bf16.mxu0 0
    %1456 = vmatpush1.bf16.msra.mxu0 %v1431
    %1457 = vmatprep.subr.bf16.mxu0 0
    %1458 = vmatpush1.bf16.msra.mxu0 0
    %1459 = vmatprep.subr.bf16.mxu0 0
    %1460 = vmatpush1.bf16.msra.mxu0 0
    %1461 = vmatprep.subr.bf16.mxu0 0
    %1462 = vmatpush1.bf16.msra.mxu0 0
    %1463 = vmatprep.subr.bf16.mxu0 0
    %1464 = vmatpush1.bf16.msra.mxu0 0
    %1465 = vmatprep.subr.bf16.mxu0 0
    %1466 = vmatpush1.bf16.msra.mxu0 0
    %1467 = vmatprep.subr.bf16.mxu0 0
    %1468 = vmatpush1.bf16.msra.mxu0 0
    %1469 = vmatprep.subr.bf16.mxu0 0
    %1470 = vmatpush1.bf16.msra.mxu0 0
    %1471 = vmatprep.subr.bf16.mxu0 0
    %1472 = vmatpush1.bf16.msra.mxu0 0
    %1473 = vmatprep.subr.bf16.mxu0 0
    %1474 = vmatpush1.bf16.msra.mxu0 0
    %1475 = vmatprep.subr.bf16.mxu0 0
    %1476 = vmatpush1.bf16.msra.mxu0 0
    %1477 = vmatprep.subr.bf16.mxu0 0
    %1478 = vmatpush1.bf16.msra.mxu0 0
    %1479 = vmatprep.subr.bf16.mxu0 0
    %1480 = vmatpush1.bf16.msra.mxu0 0
    %1481 = vmatprep.mubr.bf16.mxu0 0
    %1482 = vmatmul.mubr.bf16.gmra.mrb[0].mxu0 %v1438
    %v1483 = vpop.f32.mrb[0].mxu0
    %v1484 = vadd.f32 %v1411, %v1483
    %v1485 = vpop.f32.mrb[0].mxu0
    %v1486 = vpop.f32.mrb[0].mxu0
    %v1487 = vadd.f32 %v1411, %v1486
    %v1488 = vpop.f32.mrb[0].mxu0
    %1489 = vmatprep.mubr.bf16.mxu0 0
    %1490 = vmatmul.mubr.bf16.gmra.mrb[0].mxu0 %v1441
    %v1491 = vpop.f32.mrb[0].mxu0
    %v1492 = vadd.f32 %v1411, %v1491
    %v1493 = vpop.f32.mrb[0].mxu0
    %v1494 = vpop.f32.mrb[0].mxu0
    %v1495 = vadd.f32 %v1411, %v1494
    %v1496 = vpop.f32.mrb[0].mxu0
    %1497 = vmatprep.mubr.bf16.mxu0 0
    %1498 = vmatmul.mubr.bf16.gmra.mrb[0].mxu0 %v1444
    %v1499 = vpop.f32.mrb[0].mxu0
    %v1500 = vadd.f32 %v1411, %v1499
    %v1501 = vpop.f32.mrb[0].mxu0
    %v1502 = vpop.f32.mrb[0].mxu0
    %v1503 = vadd.f32 %v1411, %v1502
    %v1504 = vpop.f32.mrb[0].mxu0
    %1505 = vmatprep.mubr.bf16.mxu0 0
    %1506 = vmatmul.mubr.bf16.gmra.mrb[0].mxu0 %v1447
    %v1507 = vpop.f32.mrb[0].mxu0
    %v1508 = vadd.f32 %v1411, %v1507
    %v1509 = vpop.f32.mrb[0].mxu0
    %v1510 = vpop.f32.mrb[0].mxu0
    %v1511 = vadd.f32 %v1411, %v1510
    %v1512 = vpop.f32.mrb[0].mxu0
    %1513 = vdwg.mxu0
    %v1514 = vxor.u32 %v1484, 2147483648
    %v1515 = vxor.u32 %v1487, 2147483648
    %v1516 = vxor.u32 %v1492, 2147483648
    %v1517 = vxor.u32 %v1495, 2147483648
    %v1518 = vxor.u32 %v1500, 2147483648
    %v1519 = vxor.u32 %v1503, 2147483648
    %v1520 = vxor.u32 %v1508, 2147483648
    %v1521 = vxor.u32 %v1511, 2147483648
    %v1522 = vmul.f32 %v1514, 1.442695
    %v1523 = vpow.pop %v1522
    %v1524 = vmul.f32 %v1515, 1.442695
    %v1525 = vpow.pop %v1524
    %v1526 = vmul.f32 %v1516, 1.442695
    %v1527 = vpow.pop %v1526
    %v1528 = vmul.f32 %v1517, 1.442695
    %v1529 = vpow.pop %v1528
    %v1530 = vmul.f32 %v1518, 1.442695
    %v1531 = vpow.pop %v1530
    %v1532 = vmul.f32 %v1519, 1.442695
    %v1533 = vpow.pop %v1532
    %v1534 = vmul.f32 %v1520, 1.442695
    %v1535 = vpow.pop %v1534
    %v1536 = vmul.f32 %v1521, 1.442695
    %v1537 = vpow.pop %v1536
    %v1538 = vadd.f32 %v1523, 1.0
    %v1539 = vadd.f32 %v1525, 1.0
    %v1540 = vadd.f32 %v1527, 1.0
    %v1541 = vadd.f32 %v1529, 1.0
    %v1542 = vadd.f32 %v1531, 1.0
    %v1543 = vadd.f32 %v1533, 1.0
    %v1544 = vadd.f32 %v1535, 1.0
    %v1545 = vadd.f32 %v1537, 1.0
    %v1546 = vrcp.pop %v1538
    %v1547 = vmul.f32 1.0, %v1546
    %v1548 = vrcp.pop %v1539
    %v1549 = vmul.f32 1.0, %v1548
    %v1550 = vrcp.pop %v1540
    %v1551 = vmul.f32 1.0, %v1550
    %v1552 = vrcp.pop %v1541
    %v1553 = vmul.f32 1.0, %v1552
    %v1554 = vrcp.pop %v1542
    %v1555 = vmul.f32 1.0, %v1554
    %v1556 = vrcp.pop %v1543
    %v1557 = vmul.f32 1.0, %v1556
    %v1558 = vrcp.pop %v1544
    %v1559 = vmul.f32 1.0, %v1558
    %v1560 = vrcp.pop %v1545
    %v1561 = vmul.f32 1.0, %v1560
    %1562 = vst [vmem:[#allocation7] sm:$0xff] %v1547
    %1563 = vst [vmem:[#allocation7 + $0x8] sm:$0xff] %v1549
    %1564 = vst [vmem:[#allocation7 + $0x10] sm:$0xff] %v1551
    %1565 = vst [vmem:[#allocation7 + $0x18] sm:$0xff] %v1553
    %1566 = vst [vmem:[#allocation7 + $0x20] sm:$0xff] %v1555
    %1567 = vst [vmem:[#allocation7 + $0x28] sm:$0xff] %v1557
    %1568 = vst [vmem:[#allocation7 + $0x30] sm:$0xff] %v1559
    %1569 = vst [vmem:[#allocation7 + $0x38] sm:$0xff] %v1561
    // Predicated region
    $region30: #{tpu_custom_call.1} parent=1 // pred_check
      _
    $region31: #{tpu_custom_call.1} parent=1 // pred_check_branch
      %1571 = sbr.rel (0) target = $region33
    $region32: #{tpu_custom_call.1} parent=1 // pred_region
      %s1573 = ssub.s32 1024, 1024
      %1574 = vsyncadd [#allocation4], %s1573
      %s1575 = sshll.u32 [#allocation7], 4
      %s1576 = int_to_ptr.vmem [resolvable:$true] %s1575
      %1581 = dma.vmem_to_hbm [thread:$0]  %s1576, 1024, %s5, [#allocation4], 128, 128, 8
    $region33: #{tpu_custom_call.1} parent=1 // pred_fallthru
      _
    // Predicated region
    $region34: #{tpu_custom_call.1} parent=1 // pred_check
      _
    $region35: #{tpu_custom_call.1} parent=1 // pred_check_branch
      %1583 = sbr.rel (0) target = $region37
    $region36: #{tpu_custom_call.1} parent=1 // pred_region
      %1584 = dma.done [#allocation4], 1024
    $region37: #{tpu_custom_call.1} parent=1 // pred_fallthru
      _
    %1585 = vsyncpa [#allocation3], 1
    %1586 = vsyncpa [#allocation6], 1
    %1587 = vsyncpa [#allocation4], 1

</llo_original>
